<compile_context>
chip_gen: v7x
topology: tpu7x:2x2x1
jax: 0.10.0
libtpu: 0.0.40
codegen_flags: <defaults>
</compile_context>

<pallas_src>
import functools

import jax
import jax.numpy as jnp
from jax.experimental import pallas as pl
from jax.experimental.pallas import tpu as pltpu


# --------------------------------------------------------------------------- #
# Phase A: embedding gather (one-hot MXU) + input-side gate projection
# --------------------------------------------------------------------------- #
def input_proj_kernel(ids_ref,      # VMEM (TB, 1) int32
                      emb_ref,      # VMEM (V, EP)  bf16
                      wgi_ref,      # VMEM (EP, 3HP) bf16
                      bgi_ref,      # VMEM (1, 3HP) f32
                      gi_ref,       # VMEM (TB, 3HP) f32  (out)
                      *, vocab):
    ids = ids_ref[...]                                            # (TB, 1)
    tb = ids.shape[0]
    col = jax.lax.broadcasted_iota(jnp.int32, (tb, vocab), 1)
    onehot = jnp.where(col == ids, 1.0, 0.0).astype(jnp.bfloat16)  # (TB, V)
    x_emb = jnp.dot(onehot, emb_ref[...],
                    preferred_element_type=jnp.float32)            # (TB, EP)
    gi = jnp.dot(x_emb.astype(jnp.bfloat16), wgi_ref[...],
                 preferred_element_type=jnp.float32)               # (TB, 3HP)
    gi_ref[...] = gi + bgi_ref[...]
    # TODO(synk): for large vocab sizes, replace the one-hot matmul gather with a
    # scalar-prefetch-driven DMA gather and tile Phase A over T*B rows.


# --------------------------------------------------------------------------- #
# Phase B: recurrent GRU core (hidden-side matmul only), U steps per grid call
# --------------------------------------------------------------------------- #
def gru_recurrent_kernel(h0_ref,    # VMEM (B, HP)   f32
                         gi_ref,    # VMEM (U, B, 3HP) f32   (pipelined over time)
                         whh_ref,   # VMEM (HP, 3HP) bf16    (resident)
                         bhn_ref,   # VMEM (1, HP)   f32     (b_hn only; r/z biases folded in GI)
                         hall_ref,  # VMEM (U, B, HP) f32    (out: per-step hidden)
                         h_scr,     # VMEM (B, HP)   f32     (hidden-state carry)
                         *, unroll, hp):
    @pl.when(pl.program_id(0) == 0)
    def _():
        h_scr[...] = h0_ref[...]

    h = h_scr[...]                                   # (B, HP) f32
    w = whh_ref[...]                                 # (HP, 3HP) bf16
    b_hn = jnp.broadcast_to(bhn_ref[...], h.shape)   # hoisted broadcast

    for u in range(unroll):                          # static unroll
        gi = gi_ref[u]                               # (B, 3HP)
        gh = jnp.dot(h.astype(jnp.bfloat16), w,
                     preferred_element_type=jnp.float32)
        r = jax.nn.sigmoid(gi[:, 0 * hp:1 * hp] + gh[:, 0 * hp:1 * hp])
        z = jax.nn.sigmoid(gi[:, 1 * hp:2 * hp] + gh[:, 1 * hp:2 * hp])
        n = jnp.tanh(gi[:, 2 * hp:3 * hp] + r * (gh[:, 2 * hp:3 * hp] + b_hn))
        h = (1.0 - z) * n + z * h
        hall_ref[u] = h

    h_scr[...] = h


# --------------------------------------------------------------------------- #
# Phase C: batched vocab projection
# --------------------------------------------------------------------------- #
def logits_kernel(h_ref,            # VMEM (TM, HP) f32
                  wlin_ref,         # VMEM (HP, TN) bf16
                  blin_ref,         # VMEM (1, TN)  f32
                  out_ref):         # VMEM (TM, TN) f32
    out_ref[...] = (jnp.dot(h_ref[...].astype(jnp.bfloat16), wlin_ref[...],
                            preferred_element_type=jnp.float32)
                    + blin_ref[...])


# --------------------------------------------------------------------------- #
# Wrappers
# --------------------------------------------------------------------------- #
def _largest_unroll(t):
    for u in (8, 4, 2, 1):
        if t % u == 0:
            return u
    return 1


def decoder_forward_seq(x_ids_seq, hidden_state, packed):
    """Fused T-step decode.  x_ids_seq: (T, B) int32, hidden_state: (B, H) f32.
    Returns (h_final (B, H), logits (T, B, V))."""
    T, B = x_ids_seq.shape
    H, E, V = packed["H"], packed["E"], packed["V"]
    HP, EP, VP = packed["HP"], packed["EP"], packed["VP"]
    GP = 3 * HP
    TB = T * B

    # ---------------- Phase A: batched input projection ----------------------
    ids_2d = x_ids_seq.reshape(TB, 1).astype(jnp.int32)
    gi_flat = pl.pallas_call(
        functools.partial(input_proj_kernel, vocab=packed["emb_p"].shape[0]),
        out_shape=jax.ShapeDtypeStruct((TB, GP), jnp.float32),
    )(ids_2d, packed["emb_p"], packed["w_gi"], packed["b_gi"])
    gi = gi_flat.reshape(T, B, GP)

    # ---------------- Phase B: recurrence -------------------------------------
    h0_p = jnp.zeros((B, HP), jnp.float32).at[:, :H].set(
        hidden_state.astype(jnp.float32))
    U = _largest_unroll(T)

    h_all = pl.pallas_call(
        functools.partial(gru_recurrent_kernel, unroll=U, hp=HP),
        out_shape=jax.ShapeDtypeStruct((T, B, HP), jnp.float32),
        grid_spec=pltpu.PrefetchScalarGridSpec(
            num_scalar_prefetch=0,
            grid=(T // U,),
            in_specs=[
                pl.BlockSpec((B, HP), lambda i: (0, 0)),        # h0
                pl.BlockSpec((U, B, GP), lambda i: (i, 0, 0)),  # GI tiles (pipelined)
                pl.BlockSpec((HP, GP), lambda i: (0, 0)),       # W_hh (resident)
                pl.BlockSpec((1, HP), lambda i: (0, 0)),        # b_hn (resident)
            ],
            out_specs=pl.BlockSpec((U, B, HP), lambda i: (i, 0, 0)),
            scratch_shapes=[pltpu.VMEM((B, HP), jnp.float32)],  # hidden carry
        ),
        compiler_params=pltpu.CompilerParams(
            dimension_semantics=("arbitrary",),                 # time is sequential
        ),
    )(h0_p, gi, packed["w_hh_p"], packed["b_hn_p"])
    # TODO(synk): at real H/V sizes, single-buffer the resident weight BlockSpecs
    # (pipeline_mode=pl.Buffered(1)) to halve their VMEM footprint on v7x.

    # ---------------- Phase C: batched vocab projection -----------------------
    h_flat = h_all.reshape(TB, HP)
    TM = 128 if TB % 128 == 0 else TB
    TN = 256 if VP % 256 == 0 else 128

    logits_p = pl.pallas_call(
        logits_kernel,
        out_shape=jax.ShapeDtypeStruct((TB, VP), jnp.float32),
        grid_spec=pltpu.PrefetchScalarGridSpec(
            num_scalar_prefetch=0,
            grid=(TB // TM, VP // TN),
            in_specs=[
                pl.BlockSpec((TM, HP), lambda i, j: (i, 0)),
                pl.BlockSpec((HP, TN), lambda i, j: (0, j)),    # W_lin tiled over VP
                pl.BlockSpec((1, TN), lambda i, j: (0, j)),
            ],
            out_specs=pl.BlockSpec((TM, TN), lambda i, j: (i, j)),
        ),
        compiler_params=pltpu.CompilerParams(
            dimension_semantics=("parallel", "parallel"),       # both TCs on v7x
        ),
    )(h_flat, packed["w_lin_p"], packed["b_lin_p"])

    h_final = h_all[T - 1, :, :H]
    logits = logits_p.reshape(T, B, VP)[:, :, :V]
    return h_final, logits


def decoder_forward(x_ids, hidden_state, packed):
    """Single-step forward matching the PyTorch module:
    (x (B,), h (B,H)) -> [h_new (B,H), logits (B,V)]."""
    h_new, logits = decoder_forward_seq(x_ids.reshape(1, -1), hidden_state, packed)
    return [h_new, logits[0]]


# --------------------------------------------------------------------------- #
# Parameters (canonical PyTorch layout) + packing for the kernels
# --------------------------------------------------------------------------- #
def init_params(key, de_vocab_size, emb_size, pad_id, hid_size):
    k = jax.random.split(key, 7)
    scale = 0.1
    emb = scale * jax.random.normal(k[0], (de_vocab_size, emb_size), jnp.float32)
    emb = emb.at[pad_id].set(0.0)                            # nn.Embedding padding_idx row
    w_ih = scale * jax.random.normal(k[1], (3 * hid_size, emb_size), jnp.float32)
    w_hh = scale * jax.random.normal(k[2], (3 * hid_size, hid_size), jnp.float32)
    b_ih = scale * jax.random.normal(k[3], (3 * hid_size,), jnp.float32)
    b_hh = scale * jax.random.normal(k[4], (3 * hid_size,), jnp.float32)
    w_lin = scale * jax.random.normal(k[5], (de_vocab_size, hid_size), jnp.float32)
    b_lin = scale * jax.random.normal(k[6], (de_vocab_size,), jnp.float32)
    return {"emb": emb, "w_ih": w_ih, "w_hh": w_hh, "b_ih": b_ih, "b_hh": b_hh,
            "w_lin": w_lin, "b_lin": b_lin}


def _round_up(x, m):
    return ((x + m - 1) // m) * m


def pack_params(params):
    """Zero-pad E/H/V to lane multiples, fuse the input-side gate weights,
    fold foldable biases, and store matmul weights in bf16."""
    emb = params["emb"]
    V, E = emb.shape
    H = params["w_hh"].shape[1]
    EP, HP, VP = _round_up(E, 128), _round_up(H, 128), _round_up(V, 128)
    GP = 3 * HP

    # Lane-dense 2-D embedding table (bf16).
    emb_p = jnp.zeros((V, EP), jnp.float32).at[:, :E].set(emb).astype(jnp.bfloat16)

    w_ih, w_hh = params["w_ih"], params["w_hh"]              # (3H, E), (3H, H)
    b_ih, b_hh = params["b_ih"], params["b_hh"]              # (3H,)

    # Input-side fused gate weights, cols = [r | z | n], each HP lanes wide.
    w_gi = jnp.zeros((EP, GP), jnp.float32)
    for g in range(3):
        w_gi = w_gi.at[:E, g * HP:g * HP + H].set(w_ih[g * H:(g + 1) * H].T)
    w_gi = w_gi.astype(jnp.bfloat16)

    # Fold b_ih (all gates) + b_hh for r,z into the hoisted input projection.
    # b_hn must stay inside the recurrence (n = tanh(gi_n + r*(W_hn h + b_hn))).
    b_gi = jnp.zeros((1, GP), jnp.float32)
    b_gi = b_gi.at[0, 0 * HP:0 * HP + H].set(b_ih[0:H] + b_hh[0:H])
    b_gi = b_gi.at[0, 1 * HP:1 * HP + H].set(b_ih[H:2 * H] + b_hh[H:2 * H])
    b_gi = b_gi.at[0, 2 * HP:2 * HP + H].set(b_ih[2 * H:3 * H])
    b_hn = jnp.zeros((1, HP), jnp.float32).at[0, :H].set(b_hh[2 * H:3 * H])

    # Hidden-side fused gate weights.
    w_hh_p = jnp.zeros((HP, GP), jnp.float32)
    for g in range(3):
        w_hh_p = w_hh_p.at[:H, g * HP:g * HP + H].set(w_hh[g * H:(g + 1) * H].T)
    w_hh_p = w_hh_p.astype(jnp.bfloat16)

    # Output projection.
    w_lin_p = (jnp.zeros((HP, VP), jnp.float32)
               .at[:H, :V].set(params["w_lin"].T).astype(jnp.bfloat16))
    b_lin_p = jnp.zeros((1, VP), jnp.float32).at[0, :V].set(params["b_lin"])

    return {"emb_p": emb_p, "w_gi": w_gi, "b_gi": b_gi,
            "w_hh_p": w_hh_p, "b_hn_p": b_hn,
            "w_lin_p": w_lin_p, "b_lin_p": b_lin_p,
            "H": H, "E": E, "V": V, "HP": HP, "EP": EP, "VP": VP}


# --------------------------------------------------------------------------- #
# Pure-JAX reference (PyTorch GRUCell / Linear semantics), f32
# --------------------------------------------------------------------------- #
def reference_forward(x_ids, hidden_state, params):
    x = jnp.take(params["emb"], x_ids, axis=0)
    H = hidden_state.shape[-1]
    gi = x @ params["w_ih"].T + params["b_ih"]
    gh = hidden_state @ params["w_hh"].T + params["b_hh"]
    r = jax.nn.sigmoid(gi[:, :H] + gh[:, :H])
    z = jax.nn.sigmoid(gi[:, H:2 * H] + gh[:, H:2 * H])
    n = jnp.tanh(gi[:, 2 * H:] + r * gh[:, 2 * H:])
    h_new = (1.0 - z) * n + z * hidden_state
    logits = h_new @ params["w_lin"].T + params["b_lin"]
    return [h_new, logits]


# --------------------------------------------------------------------------- #
# Demo / test
# --------------------------------------------------------------------------- #
if __name__ == "__main__":
    de_vocab_size = 256
    emb_size = 32
    hid_size = 32
    pad_id = 0
    batch = 8
    seq_len = 16

    key = jax.random.PRNGKey(0)
    kp, kx, kh, ks = jax.random.split(key, 4)

    params = init_params(kp, de_vocab_size, emb_size, pad_id, hid_size)
    packed = pack_params(params)

    x_ids = jax.random.randint(kx, (batch,), 0, de_vocab_size, dtype=jnp.int32)
    hidden = jax.random.normal(kh, (batch, hid_size), jnp.float32)

    # --- single step: exact module semantics ---------------------------------
    h_new, logits = decoder_forward(x_ids, hidden, packed)
    jax.block_until_ready(h_new)
    jax.block_until_ready(logits)

    h_ref, logits_ref = reference_forward(x_ids, hidden, params)
    assert jnp.allclose(h_new, h_ref, atol=3e-2, rtol=3e-2), "hidden mismatch (1-step)"
    assert jnp.allclose(logits, logits_ref, atol=3e-2, rtol=3e-2), "logits mismatch (1-step)"

    # --- fused multi-step decode (batched input/output projections) ----------
    x_seq = jax.random.randint(ks, (seq_len, batch), 0, de_vocab_size,
                               dtype=jnp.int32)
    h_fin, logits_seq = decoder_forward_seq(x_seq, hidden, packed)
    jax.block_until_ready(h_fin)
    jax.block_until_ready(logits_seq)

    h_r = hidden
    ref_logits = []
    for t in range(seq_len):
        h_r, lg = reference_forward(x_seq[t], h_r, params)
        ref_logits.append(lg)
    logits_seq_ref = jnp.stack(ref_logits, axis=0)
    assert jnp.allclose(h_fin, h_r, atol=3e-2, rtol=3e-2), "hidden mismatch (seq)"
    assert jnp.allclose(logits_seq, logits_seq_ref, atol=3e-2, rtol=3e-2), "logits mismatch (seq)"

    print("KERNEL_OK")
</pallas_src>

<mosaic_0001>
module attributes {stable_mosaic.version = 11 : i64} {
  func.func @input_proj_kernel(%arg0: memref<8x1xi32, #tpu.memory_space<vmem>>, %arg1: memref<256x128xbf16, #tpu.memory_space<vmem>>, %arg2: memref<128x384xbf16, #tpu.memory_space<vmem>>, %arg3: memref<1x384xf32, #tpu.memory_space<vmem>>, %arg4: memref<8x384xf32, #tpu.memory_space<vmem>>) attributes {dimension_semantics = [], scalar_prefetch = 0 : i64, scratch_operands = 0 : i64, tpu.core_type = #tpu.core_type<tc>} {
    %c0 = arith.constant 0 : index
    %c0_0 = arith.constant 0 : index
    %0 = vector.load %arg0[%c0, %c0_0] : memref<8x1xi32, #tpu.memory_space<vmem>>, vector<8x1xi32>
    %1 = tpu.iota {dimensions = array<i32: 1>} : vector<8x256xi32>
    %2 = vector.broadcast %0 : vector<8x1xi32> to vector<8x256xi32>
    %3 = arith.cmpi eq, %1, %2 : vector<8x256xi32>
    %cst = arith.constant 1.000000e+00 : f32
    %cst_1 = arith.constant 0.000000e+00 : f32
    %4 = vector.broadcast %cst : f32 to vector<8x256xf32>
    %5 = vector.broadcast %cst_1 : f32 to vector<8x256xf32>
    %6 = arith.select %3, %4, %5 : vector<8x256xi1>, vector<8x256xf32>
    %7 = arith.truncf %6 : vector<8x256xf32> to vector<8x256xbf16>
    %c0_2 = arith.constant 0 : index
    %c0_3 = arith.constant 0 : index
    %8 = vector.load %arg1[%c0_2, %c0_3] : memref<256x128xbf16, #tpu.memory_space<vmem>>, vector<256x128xbf16>
    %cst_4 = arith.constant dense<0.000000e+00> : vector<8x128xf32>
    %9 = tpu.matmul %7, %8, %cst_4 {dimension_numbers = #tpu.dot_dimension_numbers<[1], [0], [0], [1], [0, 0, 1, 1], [], []>} : vector<8x256xbf16>, vector<256x128xbf16>, vector<8x128xf32> -> vector<8x128xf32>
    %10 = arith.truncf %9 : vector<8x128xf32> to vector<8x128xbf16>
    %c0_5 = arith.constant 0 : index
    %c0_6 = arith.constant 0 : index
    %11 = vector.load %arg2[%c0_5, %c0_6] : memref<128x384xbf16, #tpu.memory_space<vmem>>, vector<128x384xbf16>
    %cst_7 = arith.constant dense<0.000000e+00> : vector<8x384xf32>
    %12 = tpu.matmul %10, %11, %cst_7 {dimension_numbers = #tpu.dot_dimension_numbers<[1], [0], [0], [1], [0, 0, 1, 1], [], []>} : vector<8x128xbf16>, vector<128x384xbf16>, vector<8x384xf32> -> vector<8x384xf32>
    %c0_8 = arith.constant 0 : index
    %c0_9 = arith.constant 0 : index
    %13 = vector.load %arg3[%c0_8, %c0_9] : memref<1x384xf32, #tpu.memory_space<vmem>>, vector<1x384xf32>
    %14 = vector.broadcast %13 : vector<1x384xf32> to vector<8x384xf32>
    %15 = arith.addf %12, %14 : vector<8x384xf32>
    %c0_10 = arith.constant 0 : index
    %c0_11 = arith.constant 0 : index
    %16 = vector.load %arg4[%c0_10, %c0_11] : memref<8x384xf32, #tpu.memory_space<vmem>>, vector<8x384xf32>
    tpu.vector_store %arg4[%c0_10, %c0_11], %15 {strides = array<i32>} : memref<8x384xf32, #tpu.memory_space<vmem>>, vector<8x384xf32>,
    return
  }
}

</mosaic_0001>

<llo_original>
// kernel: tpu_custom_call.1
$region0: #{tpu_custom_call.1}
  #allocation0 [shape = 'u32[]', space=smem, size = 0x4, offset = 0x4, fixed_abs, tag = 'smem constant byte address 0x4 - core index']
  #allocation1 [shape = 'u32[144,128]{1,0:T(1,128)}', space=vmem, size = 0x12000, scoped, tag = 'internal scratch']
  %s0 = inlined_call_operand.vmem [shape: s32[8,1], index: 0, kind: input, shape index: {}]
  %s1 = inlined_call_operand.hbm [shape: bf16[256,128], index: 1, kind: input, shape index: {}]
  %s2 = inlined_call_operand.hbm [shape: bf16[128,384], index: 2, kind: input, shape index: {}]
  %s3 = inlined_call_operand.vmem [shape: f32[1,384], index: 3, kind: input, shape index: {}]
  %s4 = inlined_call_operand.hbm [shape: f32[8,384], index: 4, kind: output, shape index: {}]
  %s5 = sld [smem:[#allocation0]]
  $region34: #{tpu_custom_call.1} parent=0
    _
  %s7 = ssub.s32 1, %s5
  %s8 = scalar_select 0, %s7, %s5
  $region1: #{tpu_custom_call.1} parent=0
    #allocation2 [shape = 'u8[65536]{0}', space=vmem, size = 0x10000, scoped, tag = 'input window, operand 1, single buffered']
    #allocation3 [shape = 's32[1]{0}', space=sflag, size = 0x4, scoped, tag = 'scoped memory for tpu_custom_call.1']
    #allocation4 [shape = 's32[1]{0}', space=sflag, size = 0x4, scoped, tag = 'scoped memory for tpu_custom_call.1']
    #allocation5 [shape = 'u8[98304]{0}', space=vmem, size = 0x18000, scoped, tag = 'input window, operand 2, single buffered']
    #allocation6 [shape = 's32[1]{0}', space=sflag, size = 0x4, scoped, tag = 'scoped memory for tpu_custom_call.1']
    #allocation7 [shape = 'u8[12288]{0}', space=vmem, size = 0x3000, scoped, tag = 'output window, operand 0, single buffered']
    %9 = vsyncpa [#allocation3], 0
    %10 = vsyncpa [#allocation6], 0
    %11 = vsyncpa [#allocation4], 0
    // Predicated region
    $region2: #{tpu_custom_call.1} parent=1 // pred_check
      _
    $region3: #{tpu_custom_call.1} parent=1 // pred_check_branch
      %13 = sbr.rel (0) target = $region5
    $region4: #{tpu_custom_call.1} parent=1 // pred_region
      _
    $region5: #{tpu_custom_call.1} parent=1 // pred_fallthru
      _
    // Predicated region
    $region6: #{tpu_custom_call.1} parent=1 // pred_check
      _
    $region7: #{tpu_custom_call.1} parent=1 // pred_check_branch
      %15 = sbr.rel (0) target = $region9
    $region8: #{tpu_custom_call.1} parent=1 // pred_region
      %s17 = ssub.s32 2048, 2048
      %18 = vsyncadd [#allocation3], %s17
      %s19 = sshll.u32 [#allocation2], 4
      %s20 = int_to_ptr.vmem [resolvable:$true] %s19
      %25 = dma.hbm_to_vmem [thread:$0]  %s1, 2048, %s20, [#allocation3], 64, 64, 4
    $region9: #{tpu_custom_call.1} parent=1 // pred_fallthru
      _
    // Predicated region
    $region10: #{tpu_custom_call.1} parent=1 // pred_check
      _
    $region11: #{tpu_custom_call.1} parent=1 // pred_check_branch
      %27 = sbr.rel (0) target = $region13
    $region12: #{tpu_custom_call.1} parent=1 // pred_region
      %s29 = ssub.s32 3072, 3072
      %30 = vsyncadd [#allocation6], %s29
      %s31 = sshll.u32 [#allocation5], 4
      %s32 = int_to_ptr.vmem [resolvable:$true] %s31
      %37 = dma.hbm_to_vmem [thread:$0]  %s2, 3072, %s32, [#allocation6], 192, 192, 12
    $region13: #{tpu_custom_call.1} parent=1 // pred_fallthru
      _
    // Predicated region
    $region14: #{tpu_custom_call.1} parent=1 // pred_check
      _
    $region15: #{tpu_custom_call.1} parent=1 // pred_check_branch
      %39 = sbr.rel (0) target = $region17
    $region16: #{tpu_custom_call.1} parent=1 // pred_region
      _
    $region17: #{tpu_custom_call.1} parent=1 // pred_fallthru
      _
    // Predicated region
    $region18: #{tpu_custom_call.1} parent=1 // pred_check
      _
    $region19: #{tpu_custom_call.1} parent=1 // pred_check_branch
      %41 = sbr.rel (0) target = $region21
    $region20: #{tpu_custom_call.1} parent=1 // pred_region
      %42 = dma.done [#allocation3], 2048
    $region21: #{tpu_custom_call.1} parent=1 // pred_fallthru
      _
    // Predicated region
    $region22: #{tpu_custom_call.1} parent=1 // pred_check
      _
    $region23: #{tpu_custom_call.1} parent=1 // pred_check_branch
      %44 = sbr.rel (0) target = $region25
    $region24: #{tpu_custom_call.1} parent=1 // pred_region
      %45 = dma.done [#allocation6], 3072
    $region25: #{tpu_custom_call.1} parent=1 // pred_fallthru
      _
    %v47 = vld [vmem:[%s0] sm:$0xff]
    %v48 = vlaneseq
    %v49 = vand.u32 %v48, 127
    %v50 = vadd.s32 %v49, 128
    %51 = vset.pattern.permute.xlu0 0
    %52 = vperm.xlu0 %51, %v47
    %v53 = vpop.permute.xlu0 %52
    %vm54 = vcmp.eq.s32.totalorder %v49, %v53
    %vm55 = vcmp.eq.s32.totalorder %v50, %v53
    %v56 = vsel %vm54, 1.0, 0.0
    %v57 = vsel %vm55, 1.0, 0.0
    %v58 = vpack.c.bf16 %v56, %v56
    %v59 = vpack.c.bf16 %v57, %v57
    %v60 = vld [vmem:[#allocation2] sm:$0xf]
    %v61 = vld [vmem:[#allocation2 + $0x4] sm:$0xf]
    %v62 = vld [vmem:[#allocation2 + $0x8] sm:$0xf]
    %v63 = vld [vmem:[#allocation2 + $0xc] sm:$0xf]
    %v64 = vld [vmem:[#allocation2 + $0x10] sm:$0xf]
    %v65 = vld [vmem:[#allocation2 + $0x14] sm:$0xf]
    %v66 = vld [vmem:[#allocation2 + $0x18] sm:$0xf]
    %v67 = vld [vmem:[#allocation2 + $0x1c] sm:$0xf]
    %v68 = vld [vmem:[#allocation2 + $0x20] sm:$0xf]
    %v69 = vld [vmem:[#allocation2 + $0x24] sm:$0xf]
    %v70 = vld [vmem:[#allocation2 + $0x28] sm:$0xf]
    %v71 = vld [vmem:[#allocation2 + $0x2c] sm:$0xf]
    %v72 = vld [vmem:[#allocation2 + $0x30] sm:$0xf]
    %v73 = vld [vmem:[#allocation2 + $0x34] sm:$0xf]
    %v74 = vld [vmem:[#allocation2 + $0x38] sm:$0xf]
    %v75 = vld [vmem:[#allocation2 + $0x3c] sm:$0xf]
    %v76 = vld [vmem:[#allocation2 + $0x40] sm:$0xf]
    %v77 = vld [vmem:[#allocation2 + $0x44] sm:$0xf]
    %v78 = vld [vmem:[#allocation2 + $0x48] sm:$0xf]
    %v79 = vld [vmem:[#allocation2 + $0x4c] sm:$0xf]
    %v80 = vld [vmem:[#allocation2 + $0x50] sm:$0xf]
    %v81 = vld [vmem:[#allocation2 + $0x54] sm:$0xf]
    %v82 = vld [vmem:[#allocation2 + $0x58] sm:$0xf]
    %v83 = vld [vmem:[#allocation2 + $0x5c] sm:$0xf]
    %v84 = vld [vmem:[#allocation2 + $0x60] sm:$0xf]
    %v85 = vld [vmem:[#allocation2 + $0x64] sm:$0xf]
    %v86 = vld [vmem:[#allocation2 + $0x68] sm:$0xf]
    %v87 = vld [vmem:[#allocation2 + $0x6c] sm:$0xf]
    %v88 = vld [vmem:[#allocation2 + $0x70] sm:$0xf]
    %v89 = vld [vmem:[#allocation2 + $0x74] sm:$0xf]
    %v90 = vld [vmem:[#allocation2 + $0x78] sm:$0xf]
    %v91 = vld [vmem:[#allocation2 + $0x7c] sm:$0xf]
    %v124 = vunpack.c.l.b16 %v60
    %v125 = vunpack.c.l.b16 %v61
    %v126 = vunpack.c.l.b16 %v62
    %v127 = vunpack.c.l.b16 %v63
    %v128 = vunpack.c.l.b16 %v64
    %v129 = vunpack.c.l.b16 %v65
    %v130 = vunpack.c.l.b16 %v66
    %v131 = vunpack.c.l.b16 %v67
    %v132 = vunpack.c.l.b16 %v68
    %v133 = vunpack.c.l.b16 %v69
    %v134 = vunpack.c.l.b16 %v70
    %v135 = vunpack.c.l.b16 %v71
    %v136 = vunpack.c.l.b16 %v72
    %v137 = vunpack.c.l.b16 %v73
    %v138 = vunpack.c.l.b16 %v74
    %v139 = vunpack.c.l.b16 %v75
    %v140 = vunpack.c.l.b16 %v76
    %v141 = vunpack.c.l.b16 %v77
    %v142 = vunpack.c.l.b16 %v78
    %v143 = vunpack.c.l.b16 %v79
    %v144 = vunpack.c.l.b16 %v80
    %v145 = vunpack.c.l.b16 %v81
    %v146 = vunpack.c.l.b16 %v82
    %v147 = vunpack.c.l.b16 %v83
    %v148 = vunpack.c.l.b16 %v84
    %v149 = vunpack.c.l.b16 %v85
    %v150 = vunpack.c.l.b16 %v86
    %v151 = vunpack.c.l.b16 %v87
    %v152 = vunpack.c.l.b16 %v88
    %v153 = vunpack.c.l.b16 %v89
    %v154 = vunpack.c.l.b16 %v90
    %v155 = vunpack.c.l.b16 %v91
    %v156 = vpack.c.b16 %v125, %v124
    %v157 = vpack.c.b16 %v127, %v126
    %v158 = vpack.c.b16 %v129, %v128
    %v159 = vpack.c.b16 %v131, %v130
    %v160 = vpack.c.b16 %v133, %v132
    %v161 = vpack.c.b16 %v135, %v134
    %v162 = vpack.c.b16 %v137, %v136
    %v163 = vpack.c.b16 %v139, %v138
    %v164 = vpack.c.b16 %v141, %v140
    %v165 = vpack.c.b16 %v143, %v142
    %v166 = vpack.c.b16 %v145, %v144
    %v167 = vpack.c.b16 %v147, %v146
    %v168 = vpack.c.b16 %v149, %v148
    %v169 = vpack.c.b16 %v151, %v150
    %v170 = vpack.c.b16 %v153, %v152
    %v171 = vpack.c.b16 %v155, %v154
    %188 = vmatprep.subr.bf16.mxu0 0
    %189 = vmatpush1.bf16.msra.mxu0 %v156
    %190 = vmatprep.subr.bf16.mxu0 0
    %191 = vmatpush1.bf16.msra.mxu0 %v157
    %192 = vmatprep.subr.bf16.mxu0 0
    %193 = vmatpush1.bf16.msra.mxu0 %v158
    %194 = vmatprep.subr.bf16.mxu0 0
    %195 = vmatpush1.bf16.msra.mxu0 %v159
    %196 = vmatprep.subr.bf16.mxu0 0
    %197 = vmatpush1.bf16.msra.mxu0 %v160
    %198 = vmatprep.subr.bf16.mxu0 0
    %199 = vmatpush1.bf16.msra.mxu0 %v161
    %200 = vmatprep.subr.bf16.mxu0 0
    %201 = vmatpush1.bf16.msra.mxu0 %v162
    %202 = vmatprep.subr.bf16.mxu0 0
    %203 = vmatpush1.bf16.msra.mxu0 %v163
    %204 = vmatprep.subr.bf16.mxu0 0
    %205 = vmatpush1.bf16.msra.mxu0 %v164
    %206 = vmatprep.subr.bf16.mxu0 0
    %207 = vmatpush1.bf16.msra.mxu0 %v165
    %208 = vmatprep.subr.bf16.mxu0 0
    %209 = vmatpush1.bf16.msra.mxu0 %v166
    %210 = vmatprep.subr.bf16.mxu0 0
    %211 = vmatpush1.bf16.msra.mxu0 %v167
    %212 = vmatprep.subr.bf16.mxu0 0
    %213 = vmatpush1.bf16.msra.mxu0 %v168
    %214 = vmatprep.subr.bf16.mxu0 0
    %215 = vmatpush1.bf16.msra.mxu0 %v169
    %216 = vmatprep.subr.bf16.mxu0 0
    %217 = vmatpush1.bf16.msra.mxu0 %v170
    %218 = vmatprep.subr.bf16.mxu0 0
    %219 = vmatpush1.bf16.msra.mxu0 %v171
    %220 = vmatprep.mubr.bf16.mxu0 %v59
    %221 = vmatmul.mubr.bf16.gmra.mrb[0].mxu0 %v58
    %v222 = vpop.f32.mrb[0].mxu0
    %v223 = vadd.f32 0.0, %v222
    %v224 = vpop.f32.mrb[0].mxu0
    %v225 = vpop.f32.mrb[0].mxu0
    %v226 = vpop.f32.mrb[0].mxu0
    %227 = vdwg.mxu0
    %v228 = vpack.c.bf16 %v223, %v223
    %v229 = vld [vmem:[#allocation5] sm:$0xff]
    %v230 = vld [vmem:[#allocation5 + $0x8] sm:$0xf]
    %v231 = vld [vmem:[#allocation5 + $0xc] sm:$0xff]
    %v232 = vld [vmem:[#allocation5 + $0x14] sm:$0xf]
    %v233 = vld [vmem:[#allocation5 + $0x18] sm:$0xff]
    %v234 = vld [vmem:[#allocation5 + $0x20] sm:$0xf]
    %v235 = vld [vmem:[#allocation5 + $0x24] sm:$0xff]
    %v236 = vld [vmem:[#allocation5 + $0x2c] sm:$0xf]
    %v237 = vld [vmem:[#allocation5 + $0x30] sm:$0xff]
    %v238 = vld [vmem:[#allocation5 + $0x38] sm:$0xf]
    %v239 = vld [vmem:[#allocation5 + $0x3c] sm:$0xff]
    %v240 = vld [vmem:[#allocation5 + $0x44] sm:$0xf]
    %v241 = vld [vmem:[#allocation5 + $0x48] sm:$0xff]
    %v242 = vld [vmem:[#allocation5 + $0x50] sm:$0xf]
    %v243 = vld [vmem:[#allocation5 + $0x54] sm:$0xff]
    %v244 = vld [vmem:[#allocation5 + $0x5c] sm:$0xf]
    %v245 = vld [vmem:[#allocation5 + $0x60] sm:$0xff]
    %v246 = vld [vmem:[#allocation5 + $0x68] sm:$0xf]
    %v247 = vld [vmem:[#allocation5 + $0x6c] sm:$0xff]
    %v248 = vld [vmem:[#allocation5 + $0x74] sm:$0xf]
    %v249 = vld [vmem:[#allocation5 + $0x78] sm:$0xff]
    %v250 = vld [vmem:[#allocation5 + $0x80] sm:$0xf]
    %v251 = vld [vmem:[#allocation5 + $0x84] sm:$0xff]
    %v252 = vld [vmem:[#allocation5 + $0x8c] sm:$0xf]
    %v253 = vld [vmem:[#allocation5 + $0x90] sm:$0xff]
    %v254 = vld [vmem:[#allocation5 + $0x98] sm:$0xf]
    %v255 = vld [vmem:[#allocation5 + $0x9c] sm:$0xff]
    %v256 = vld [vmem:[#allocation5 + $0xa4] sm:$0xf]
    %v257 = vld [vmem:[#allocation5 + $0xa8] sm:$0xff]
    %v258 = vld [vmem:[#allocation5 + $0xb0] sm:$0xf]
    %v259 = vld [vmem:[#allocation5 + $0xb4] sm:$0xff]
    %v260 = vld [vmem:[#allocation5 + $0xbc] sm:$0xf]
    %v261 = vld [vmem:[%s3] sm:$0x7]
    %v263 = vlaneseq
    %v264 = vshrl.u32 %v263, 7
    %v265 = vsub.s32 0, %v264
    %v266 = vrot.slane %v261, %v265
    %v267 = vlaneseq
    %v268 = vshrl.u32 %v267, 7
    %v269 = vsub.s32 1, %v268
    %v270 = vrot.slane %v261, %v269
    %v271 = vlaneseq
    %v272 = vshrl.u32 %v271, 7
    %v273 = vsub.s32 2, %v272
    %v274 = vrot.slane %v261, %v273
    %v310 = vunpack.c.l.b16 %v229
    %v311 = vunpack.c.h.b16 %v229
    %v312 = vunpack.c.l.b16 %v230
    %v313 = vunpack.c.l.b16 %v231
    %v314 = vunpack.c.h.b16 %v231
    %v315 = vunpack.c.l.b16 %v232
    %v316 = vunpack.c.l.b16 %v233
    %v317 = vunpack.c.h.b16 %v233
    %v318 = vunpack.c.l.b16 %v234
    %v319 = vunpack.c.l.b16 %v235
    %v320 = vunpack.c.h.b16 %v235
    %v321 = vunpack.c.l.b16 %v236
    %v322 = vunpack.c.l.b16 %v237
    %v323 = vunpack.c.h.b16 %v237
    %v324 = vunpack.c.l.b16 %v238
    %v325 = vunpack.c.l.b16 %v239
    %v326 = vunpack.c.h.b16 %v239
    %v327 = vunpack.c.l.b16 %v240
    %v328 = vunpack.c.l.b16 %v241
    %v329 = vunpack.c.h.b16 %v241
    %v330 = vunpack.c.l.b16 %v242
    %v331 = vunpack.c.l.b16 %v243
    %v332 = vunpack.c.h.b16 %v243
    %v333 = vunpack.c.l.b16 %v244
    %v334 = vunpack.c.l.b16 %v245
    %v335 = vunpack.c.h.b16 %v245
    %v336 = vunpack.c.l.b16 %v246
    %v337 = vunpack.c.l.b16 %v247
    %v338 = vunpack.c.h.b16 %v247
    %v339 = vunpack.c.l.b16 %v248
    %v340 = vunpack.c.l.b16 %v249
    %v341 = vunpack.c.h.b16 %v249
    %v342 = vunpack.c.l.b16 %v250
    %v343 = vunpack.c.l.b16 %v251
    %v344 = vunpack.c.h.b16 %v251
    %v345 = vunpack.c.l.b16 %v252
    %v346 = vunpack.c.l.b16 %v253
    %v347 = vunpack.c.h.b16 %v253
    %v348 = vunpack.c.l.b16 %v254
    %v349 = vunpack.c.l.b16 %v255
    %v350 = vunpack.c.h.b16 %v255
    %v351 = vunpack.c.l.b16 %v256
    %v352 = vunpack.c.l.b16 %v257
    %v353 = vunpack.c.h.b16 %v257
    %v354 = vunpack.c.l.b16 %v258
    %v355 = vunpack.c.l.b16 %v259
    %v356 = vunpack.c.h.b16 %v259
    %v357 = vunpack.c.l.b16 %v260
    %v358 = vpack.c.b16 %v313, %v310
    %v359 = vpack.c.b16 %v314, %v311
    %v360 = vpack.c.b16 %v315, %v312
    %v361 = vpack.c.b16 %v319, %v316
    %v362 = vpack.c.b16 %v320, %v317
    %v363 = vpack.c.b16 %v321, %v318
    %v364 = vpack.c.b16 %v325, %v322
    %v365 = vpack.c.b16 %v326, %v323
    %v366 = vpack.c.b16 %v327, %v324
    %v367 = vpack.c.b16 %v331, %v328
    %v368 = vpack.c.b16 %v332, %v329
    %v369 = vpack.c.b16 %v333, %v330
    %v370 = vpack.c.b16 %v337, %v334
    %v371 = vpack.c.b16 %v338, %v335
    %v372 = vpack.c.b16 %v339, %v336
    %v373 = vpack.c.b16 %v343, %v340
    %v374 = vpack.c.b16 %v344, %v341
    %v375 = vpack.c.b16 %v345, %v342
    %v376 = vpack.c.b16 %v349, %v346
    %v377 = vpack.c.b16 %v350, %v347
    %v378 = vpack.c.b16 %v351, %v348
    %v379 = vpack.c.b16 %v355, %v352
    %v380 = vpack.c.b16 %v356, %v353
    %v381 = vpack.c.b16 %v357, %v354
    %406 = vmatprep.subr.bf16.mxu0 %v359
    %407 = vmatpush1.bf16.msra.mxu0 %v358
    %408 = vmatprep.subr.bf16.mxu0 %v362
    %409 = vmatpush1.bf16.msra.mxu0 %v361
    %410 = vmatprep.subr.bf16.mxu0 %v365
    %411 = vmatpush1.bf16.msra.mxu0 %v364
    %412 = vmatprep.subr.bf16.mxu0 %v368
    %413 = vmatpush1.bf16.msra.mxu0 %v367
    %414 = vmatprep.subr.bf16.mxu0 %v371
    %415 = vmatpush1.bf16.msra.mxu0 %v370
    %416 = vmatprep.subr.bf16.mxu0 %v374
    %417 = vmatpush1.bf16.msra.mxu0 %v373
    %418 = vmatprep.subr.bf16.mxu0 %v377
    %419 = vmatpush1.bf16.msra.mxu0 %v376
    %420 = vmatprep.subr.bf16.mxu0 %v380
    %421 = vmatpush1.bf16.msra.mxu0 %v379
    %422 = vmatprep.subr.bf16.mxu0 0
    %423 = vmatpush1.bf16.msra.mxu0 0
    %424 = vmatprep.subr.bf16.mxu0 0
    %425 = vmatpush1.bf16.msra.mxu0 0
    %426 = vmatprep.subr.bf16.mxu0 0
    %427 = vmatpush1.bf16.msra.mxu0 0
    %428 = vmatprep.subr.bf16.mxu0 0
    %429 = vmatpush1.bf16.msra.mxu0 0
    %430 = vmatprep.subr.bf16.mxu0 0
    %431 = vmatpush1.bf16.msra.mxu0 0
    %432 = vmatprep.subr.bf16.mxu0 0
    %433 = vmatpush1.bf16.msra.mxu0 0
    %434 = vmatprep.subr.bf16.mxu0 0
    %435 = vmatpush1.bf16.msra.mxu0 0
    %436 = vmatprep.subr.bf16.mxu0 0
    %437 = vmatpush1.bf16.msra.mxu0 0
    %438 = vmatprep.mubr.bf16.mxu0 0
    %439 = vmatmul.mubr.bf16.gmra.mrb[0].mxu0 %v228
    %v440 = vpop.f32.mrb[0].mxu0
    %v441 = vadd.f32 %v266, %v440
    %v442 = vpop.f32.mrb[0].mxu0
    %v443 = vadd.f32 %v270, %v442
    %v444 = vpop.f32.mrb[0].mxu0
    %v445 = vpop.f32.mrb[0].mxu0
    %446 = vdwg.mxu0
    %447 = vmatprep.subr.bf16.mxu0 0
    %448 = vmatpush1.bf16.msra.mxu0 %v360
    %449 = vmatprep.subr.bf16.mxu0 0
    %450 = vmatpush1.bf16.msra.mxu0 %v363
    %451 = vmatprep.subr.bf16.mxu0 0
    %452 = vmatpush1.bf16.msra.mxu0 %v366
    %453 = vmatprep.subr.bf16.mxu0 0
    %454 = vmatpush1.bf16.msra.mxu0 %v369
    %455 = vmatprep.subr.bf16.mxu0 0
    %456 = vmatpush1.bf16.msra.mxu0 %v372
    %457 = vmatprep.subr.bf16.mxu0 0
    %458 = vmatpush1.bf16.msra.mxu0 %v375
    %459 = vmatprep.subr.bf16.mxu0 0
    %460 = vmatpush1.bf16.msra.mxu0 %v378
    %461 = vmatprep.subr.bf16.mxu0 0
    %462 = vmatpush1.bf16.msra.mxu0 %v381
    %463 = vmatprep.subr.bf16.mxu0 0
    %464 = vmatpush1.bf16.msra.mxu0 0
    %465 = vmatprep.subr.bf16.mxu0 0
    %466 = vmatpush1.bf16.msra.mxu0 0
    %467 = vmatprep.subr.bf16.mxu0 0
    %468 = vmatpush1.bf16.msra.mxu0 0
    %469 = vmatprep.subr.bf16.mxu0 0
    %470 = vmatpush1.bf16.msra.mxu0 0
    %471 = vmatprep.subr.bf16.mxu0 0
    %472 = vmatpush1.bf16.msra.mxu0 0
    %473 = vmatprep.subr.bf16.mxu0 0
    %474 = vmatpush1.bf16.msra.mxu0 0
    %475 = vmatprep.subr.bf16.mxu0 0
    %476 = vmatpush1.bf16.msra.mxu0 0
    %477 = vmatprep.subr.bf16.mxu0 0
    %478 = vmatpush1.bf16.msra.mxu0 0
    %479 = vmatprep.mubr.bf16.mxu0 0
    %480 = vmatmul.mubr.bf16.gmra.mrb[0].mxu0 %v228
    %v481 = vpop.f32.mrb[0].mxu0
    %v482 = vadd.f32 %v274, %v481
    %v483 = vpop.f32.mrb[0].mxu0
    %v484 = vpop.f32.mrb[0].mxu0
    %v485 = vpop.f32.mrb[0].mxu0
    %486 = vdwg.mxu0
    %487 = vst [vmem:[#allocation7] sm:$0xff] %v441
    %488 = vst [vmem:[#allocation7 + $0x8] sm:$0xff] %v443
    %489 = vst [vmem:[#allocation7 + $0x10] sm:$0xff] %v482
    // Predicated region
    $region26: #{tpu_custom_call.1} parent=1 // pred_check
      _
    $region27: #{tpu_custom_call.1} parent=1 // pred_check_branch
      %491 = sbr.rel (0) target = $region29
    $region28: #{tpu_custom_call.1} parent=1 // pred_region
      %s493 = ssub.s32 384, 384
      %494 = vsyncadd [#allocation4], %s493
      %s496 = sshll.u32 [#allocation7], 4
      %s497 = int_to_ptr.vmem [resolvable:$true] %s496
      %499 = dma.vmem_to_hbm [thread:$0]  %s497, 384, %s4, [#allocation4]
    $region29: #{tpu_custom_call.1} parent=1 // pred_fallthru
      _
    // Predicated region
    $region30: #{tpu_custom_call.1} parent=1 // pred_check
      _
    $region31: #{tpu_custom_call.1} parent=1 // pred_check_branch
      %501 = sbr.rel (0) target = $region33
    $region32: #{tpu_custom_call.1} parent=1 // pred_region
      %502 = dma.done [#allocation4], 384
    $region33: #{tpu_custom_call.1} parent=1 // pred_fallthru
      _
    %503 = vsyncpa [#allocation3], 1
    %504 = vsyncpa [#allocation6], 1
    %505 = vsyncpa [#allocation4], 1

</llo_original>
